<compile_context>
chip_gen: v5e
topology: v5e:2x2
jax: 0.10.0
libtpu: 0.0.40
codegen_flags: <defaults>
</compile_context>

<pallas_src>
import functools

import jax
import jax.numpy as jnp
from jax.experimental import pallas as pl
from jax.experimental.pallas import tpu as pltpu


def _channel_attention_kernel(x_ref, w1t_ref, w2t_ref, o_ref,
                              sum_ref, max_ref, *, seq_len, mask_tail):
    # x_ref   : (TB, C, TL)  current (batch-block, L-block) slab
    # w1t_ref : (C, Cr), w2t_ref : (Cr, C)
    # o_ref   : (TB, C)
    # sum_ref / max_ref : (TB, C) f32 accumulators, persist across the L axis
    l = pl.program_id(1)
    n_l = pl.num_programs(1)

    @pl.when(l == 0)
    def _():
        sum_ref[...] = jnp.zeros_like(sum_ref)
        max_ref[...] = jnp.full_like(max_ref, -jnp.inf)

    x = x_ref[...]                                   # keep input dtype (no full f32 copy)
    if mask_tail:
        # Last L block may run past seq_len; mask so garbage columns cannot
        # corrupt valid rows' sum / max.
        tl = x.shape[-1]
        col = l * tl + jax.lax.broadcasted_iota(jnp.int32, x.shape, 2)
        valid = col < seq_len
        x_sum = jnp.where(valid, x, jnp.zeros_like(x))
        x_max = jnp.where(valid, x, jnp.full_like(x, -jnp.inf))
    else:
        x_sum = x
        x_max = x

    # AdaptiveAvgPool1d(1) / AdaptiveMaxPool1d(1): streamed reduction over L.
    sum_ref[...] += jnp.sum(x_sum, axis=-1, dtype=jnp.float32)          # (TB, C)
    max_ref[...] = jnp.maximum(max_ref[...],
                               jnp.max(x_max, axis=-1).astype(jnp.float32))

    @pl.when(l == n_l - 1)
    def _():
        tb = sum_ref.shape[0]
        avg = sum_ref[...] * (1.0 / seq_len)                            # (TB, C)
        mx = max_ref[...]                                               # (TB, C)
        # Stack avg & max -> one matmul pair, one ReLU, one sigmoid.
        pooled = jnp.concatenate([avg, mx], axis=0)                     # (2*TB, C)
        h = jnp.dot(pooled, w1t_ref[...], preferred_element_type=jnp.float32)
        h = jnp.maximum(h, 0.0)                                         # ReLU
        y = jnp.dot(h, w2t_ref[...], preferred_element_type=jnp.float32)
        s = jax.nn.sigmoid(y)                                           # Sigmoid
        o_ref[...] = (s[:tb] + s[tb:]).astype(o_ref.dtype)              # fc(avg)+fc(max)


def channel_attention_1d(x, w1, w2, *, target_block_bytes=12 * 1024 * 1024):
    """x: (B, C, L); w1: (Cr, C, 1) conv1 weight; w2: (C, Cr, 1) conv2 weight.

    Returns (B, C, 1), matching the PyTorch module's output shape.
    """
    B, C, L = x.shape
    Cr = w1.shape[0]
    itemsize = jnp.dtype(x.dtype).itemsize
    sub = {4: 8, 2: 16, 1: 32}.get(itemsize, 8)      # sublane packing multiple

    # Kernel-size-1 conv == channel matmul; pre-transpose so no in-kernel transpose.
    w1t = jnp.transpose(w1[:, :, 0], (1, 0))         # (C, Cr)
    w2t = jnp.transpose(w2[:, :, 0], (1, 0))         # (Cr, C)

    # ---- L tiling: decouple the VMEM block from the problem's C*L ----
    tb_min = B if B < sub else sub
    if tb_min * C * L * itemsize <= target_block_bytes:
        tl = L
    else:
        tl = (target_block_bytes // (tb_min * C * itemsize)) // 128 * 128
        tl = max(128, tl)
        if tl >= L:
            tl = L
    n_l = pl.cdiv(L, tl)
    mask_tail = (n_l > 1) and (L % tl != 0)

    # ---- batch tiling ----
    block_l_bytes = C * tl * itemsize
    tb = max(1, target_block_bytes // block_l_bytes)
    if tb >= B:
        if B >= 2 * sub:
            # Keep >=2 (up to 4) batch blocks so the "parallel" axis can be
            # sharded across both TensorCores on v7x and the pipeline overlaps.
            n_target = min(4, B // sub)
            tb = -(-B // n_target)                   # ceil(B / n_target)
            tb = -(-tb // sub) * sub                 # round up to sublane multiple
        else:
            tb = B                                   # full-dim block (always legal)
    else:
        tb = max(tb_min, (tb // sub) * sub)          # sublane-aligned (or full B)
        tb = min(tb, B)
    n_b = pl.cdiv(B, tb)

    # ---- VMEM budget: actual need + margin, capped below v7x's 64 MiB physical ----
    x_block_bytes = tb * C * tl * itemsize
    out_block_bytes = tb * C * itemsize
    w_bytes = (w1t.size + w2t.size) * jnp.dtype(w1t.dtype).itemsize
    scratch_bytes = 2 * tb * C * 4
    vmem_need = 2 * x_block_bytes + 2 * out_block_bytes + 2 * w_bytes + scratch_bytes
    vmem_limit = min(max(2 * vmem_need, 32 << 20), 48 << 20)
    vmem_limit = max(vmem_limit, vmem_need + (4 << 20))

    out = pl.pallas_call(
        functools.partial(_channel_attention_kernel, seq_len=L, mask_tail=mask_tail),
        out_shape=jax.ShapeDtypeStruct((B, C), x.dtype),
        grid_spec=pltpu.PrefetchScalarGridSpec(
            num_scalar_prefetch=0,
            grid=(n_b, n_l),
            in_specs=[
                pl.BlockSpec((tb, C, tl), lambda b, l: (b, 0, l)),
                pl.BlockSpec((C, Cr), lambda b, l: (0, 0)),
                pl.BlockSpec((Cr, C), lambda b, l: (0, 0)),
            ],
            out_specs=pl.BlockSpec((tb, C), lambda b, l: (b, 0)),
            scratch_shapes=[pltpu.VMEM((tb, C), jnp.float32),
                            pltpu.VMEM((tb, C), jnp.float32)],
        ),
        compiler_params=pltpu.CompilerParams(
            dimension_semantics=("parallel", "arbitrary"),
            vmem_limit_bytes=int(vmem_limit)),
    )(x, w1t, w2t)

    return out[:, :, None]                           # (B, C, 1)


def reference(x, w1, w2):
    # Pure-JAX reference of the PyTorch forward.
    avg = jnp.mean(x, axis=-1, keepdims=True)        # (B, C, 1)
    mx = jnp.max(x, axis=-1, keepdims=True)          # (B, C, 1)

    def fc(v):                                       # v: (B, C, 1)
        h = jnp.einsum('bci,oc->boi', v, w1[:, :, 0])
        h = jnp.maximum(h, 0.0)
        y = jnp.einsum('bri,or->boi', h, w2[:, :, 0])
        return jax.nn.sigmoid(y)

    return fc(avg) + fc(mx)


if __name__ == "__main__":
    key = jax.random.PRNGKey(0)

    # Case 1: small shapes matching the module (reduction_ratio=16).
    B, C, L = 2, 32, 16
    Cr = C // 16
    kx, k1, k2 = jax.random.split(key, 3)
    x = jax.random.normal(kx, (B, C, L), dtype=jnp.float32)
    bound1 = 1.0 / (C ** 0.5)
    bound2 = 1.0 / (Cr ** 0.5)
    w1 = jax.random.uniform(k1, (Cr, C, 1), jnp.float32, -bound1, bound1)
    w2 = jax.random.uniform(k2, (C, Cr, 1), jnp.float32, -bound2, bound2)

    out = jax.block_until_ready(channel_attention_1d(x, w1, w2))
    ref = reference(x, w1, w2)
    assert out.shape == (B, C, 1), out.shape
    assert jnp.allclose(out, ref, atol=1e-5, rtol=1e-5), float(jnp.max(jnp.abs(out - ref)))

    # Case 2 (still small): forces ragged batch blocks, L tiling and the
    # in-kernel ragged-L mask by shrinking the target block size.
    B2, C2, L2 = 10, 64, 300
    Cr2 = C2 // 16
    kx2, k3, k4 = jax.random.split(jax.random.PRNGKey(0), 3)
    x2 = jax.random.normal(kx2, (B2, C2, L2), dtype=jnp.float32)
    w1b = jax.random.uniform(k3, (Cr2, C2, 1), jnp.float32,
                             -1.0 / C2 ** 0.5, 1.0 / C2 ** 0.5)
    w2b = jax.random.uniform(k4, (C2, Cr2, 1), jnp.float32,
                             -1.0 / Cr2 ** 0.5, 1.0 / Cr2 ** 0.5)
    out2 = jax.block_until_ready(
        channel_attention_1d(x2, w1b, w2b, target_block_bytes=64 * 1024))
    ref2 = reference(x2, w1b, w2b)
    assert out2.shape == (B2, C2, 1), out2.shape
    assert jnp.allclose(out2, ref2, atol=1e-5, rtol=1e-5), float(jnp.max(jnp.abs(out2 - ref2)))

    print("KERNEL_OK")
</pallas_src>

<mosaic_0001>
module attributes {stable_mosaic.version = 11 : i64} {
  func.func @_channel_attention_kernel(%arg0: i32, %arg1: i32, %arg2: memref<2x32x16xf32, #tpu.memory_space<vmem>>, %arg3: memref<32x2xf32, #tpu.memory_space<vmem>>, %arg4: memref<2x32xf32, #tpu.memory_space<vmem>>, %arg5: memref<2x32xf32, #tpu.memory_space<vmem>>, %arg6: memref<2x32xf32, #tpu.memory_space<vmem>>, %arg7: memref<2x32xf32, #tpu.memory_space<vmem>>) attributes {dimension_semantics = [#tpu.dimension_semantics<parallel>, #tpu.dimension_semantics<arbitrary>], iteration_bounds = array<i64: 1, 1>, scalar_prefetch = 0 : i64, scratch_operands = 2 : i64, tpu.core_type = #tpu.core_type<tc>, window_params = [{transform_indices = @transform_0, window_bounds = array<i64: 2, 32, 16>}, {pipeline_mode = #tpu.pipeline_mode<synchronous>, transform_indices = @transform_1, window_bounds = array<i64: 32, 2>}, {pipeline_mode = #tpu.pipeline_mode<synchronous>, transform_indices = @transform_2, window_bounds = array<i64: 2, 32>}, {transform_indices = @transform_3, window_bounds = array<i64: 2, 32>}]} {
    %c0_i32 = arith.constant 0 : i32
    %0 = arith.cmpi eq, %arg1, %c0_i32 : i32
    %1 = arith.extui %0 : i1 to i32
    %c0_i32_0 = arith.constant 0 : i32
    %2 = arith.cmpi ne, %1, %c0_i32_0 : i32
    scf.if %2 {
      %cst_14 = arith.constant 0.000000e+00 : f32
      %15 = vector.broadcast %cst_14 : f32 to vector<2x32xf32>
      %c0_15 = arith.constant 0 : index
      %c0_16 = arith.constant 0 : index
      %16 = vector.load %arg6[%c0_15, %c0_16] : memref<2x32xf32, #tpu.memory_space<vmem>>, vector<2x32xf32>
      tpu.vector_store %arg6[%c0_15, %c0_16], %15 {strides = array<i32>} : memref<2x32xf32, #tpu.memory_space<vmem>>, vector<2x32xf32>,
      %cst_17 = arith.constant 0xFF800000 : f32
      %17 = vector.broadcast %cst_17 : f32 to vector<2x32xf32>
      %c0_18 = arith.constant 0 : index
      %c0_19 = arith.constant 0 : index
      %18 = vector.load %arg7[%c0_18, %c0_19] : memref<2x32xf32, #tpu.memory_space<vmem>>, vector<2x32xf32>
      tpu.vector_store %arg7[%c0_18, %c0_19], %17 {strides = array<i32>} : memref<2x32xf32, #tpu.memory_space<vmem>>, vector<2x32xf32>,
    } else {
    }
    %c0 = arith.constant 0 : index
    %c0_1 = arith.constant 0 : index
    %c0_2 = arith.constant 0 : index
    %3 = vector.load %arg2[%c0, %c0_1, %c0_2] : memref<2x32x16xf32, #tpu.memory_space<vmem>>, vector<2x32x16xf32>
    %c0_3 = arith.constant 0 : index
    %c0_4 = arith.constant 0 : index
    %4 = vector.load %arg6[%c0_3, %c0_4] : memref<2x32xf32, #tpu.memory_space<vmem>>, vector<2x32xf32>
    %cst = arith.constant dense<0.000000e+00> : vector<2x32xf32>
    %5 = vector.multi_reduction <add>, %3, %cst [2] : vector<2x32x16xf32> to vector<2x32xf32>
    %6 = arith.addf %4, %5 : vector<2x32xf32>
    %c0_5 = arith.constant 0 : index
    %c0_6 = arith.constant 0 : index
    %7 = vector.load %arg6[%c0_5, %c0_6] : memref<2x32xf32, #tpu.memory_space<vmem>>, vector<2x32xf32>
    tpu.vector_store %arg6[%c0_5, %c0_6], %6 {strides = array<i32>} : memref<2x32xf32, #tpu.memory_space<vmem>>, vector<2x32xf32>,
    %c0_7 = arith.constant 0 : index
    %c0_8 = arith.constant 0 : index
    %8 = vector.load %arg7[%c0_7, %c0_8] : memref<2x32xf32, #tpu.memory_space<vmem>>, vector<2x32xf32>
    %cst_9 = arith.constant dense<0xFF800000> : vector<2x32xf32>
    %9 = vector.multi_reduction <maximumf>, %3, %cst_9 [2] : vector<2x32x16xf32> to vector<2x32xf32>
    %10 = arith.maximumf %8, %9 : vector<2x32xf32>
    %c0_10 = arith.constant 0 : index
    %c0_11 = arith.constant 0 : index
    %11 = vector.load %arg7[%c0_10, %c0_11] : memref<2x32xf32, #tpu.memory_space<vmem>>, vector<2x32xf32>
    tpu.vector_store %arg7[%c0_10, %c0_11], %10 {strides = array<i32>} : memref<2x32xf32, #tpu.memory_space<vmem>>, vector<2x32xf32>,
    %c0_i32_12 = arith.constant 0 : i32
    %12 = arith.cmpi eq, %arg1, %c0_i32_12 : i32
    %13 = arith.extui %12 : i1 to i32
    %c0_i32_13 = arith.constant 0 : i32
    %14 = arith.cmpi ne, %13, %c0_i32_13 : i32
    scf.if %14 {
      %c0_14 = arith.constant 0 : index
      %c0_15 = arith.constant 0 : index
      %15 = vector.load %arg6[%c0_14, %c0_15] : memref<2x32xf32, #tpu.memory_space<vmem>>, vector<2x32xf32>
      %cst_16 = arith.constant 6.250000e-02 : f32
      %16 = vector.broadcast %cst_16 : f32 to vector<2x32xf32>
      %17 = arith.mulf %15, %16 : vector<2x32xf32>
      %c0_17 = arith.constant 0 : index
      %c0_18 = arith.constant 0 : index
      %18 = vector.load %arg7[%c0_17, %c0_18] : memref<2x32xf32, #tpu.memory_space<vmem>>, vector<2x32xf32>
      %19 = tpu.concatenate %17, %18 in 0 : vector<2x32xf32>, vector<2x32xf32> -> vector<4x32xf32>
      %c0_19 = arith.constant 0 : index
      %c0_20 = arith.constant 0 : index
      %20 = vector.load %arg3[%c0_19, %c0_20] : memref<32x2xf32, #tpu.memory_space<vmem>>, vector<32x2xf32>
      %cst_21 = arith.constant dense<0.000000e+00> : vector<4x2xf32>
      %21 = tpu.matmul %19, %20, %cst_21 {dimension_numbers = #tpu.dot_dimension_numbers<[1], [0], [0], [1], [0, 0, 1, 1], [], []>} : vector<4x32xf32>, vector<32x2xf32>, vector<4x2xf32> -> vector<4x2xf32>
      %cst_22 = arith.constant 0.000000e+00 : f32
      %22 = vector.broadcast %cst_22 : f32 to vector<4x2xf32>
      %23 = arith.maximumf %21, %22 : vector<4x2xf32>
      %c0_23 = arith.constant 0 : index
      %c0_24 = arith.constant 0 : index
      %24 = vector.load %arg4[%c0_23, %c0_24] : memref<2x32xf32, #tpu.memory_space<vmem>>, vector<2x32xf32>
      %cst_25 = arith.constant dense<0.000000e+00> : vector<4x32xf32>
      %25 = tpu.matmul %23, %24, %cst_25 {dimension_numbers = #tpu.dot_dimension_numbers<[1], [0], [0], [1], [0, 0, 1, 1], [], []>} : vector<4x2xf32>, vector<2x32xf32>, vector<4x32xf32> -> vector<4x32xf32>
      %26 = arith.negf %25 : vector<4x32xf32>
      %27 = math.exp %26 : vector<4x32xf32>
      %cst_26 = arith.constant 1.000000e+00 : f32
      %28 = vector.broadcast %cst_26 : f32 to vector<4x32xf32>
      %29 = arith.addf %28, %27 : vector<4x32xf32>
      %30 = arith.divf %28, %29 : vector<4x32xf32>
      %31 = vector.extract_strided_slice %30 {offsets = [0, 0], sizes = [2, 32], strides = [1, 1]} : vector<4x32xf32> to vector<2x32xf32>
      %32 = vector.extract_strided_slice %30 {offsets = [2, 0], sizes = [2, 32], strides = [1, 1]} : vector<4x32xf32> to vector<2x32xf32>
      %33 = arith.addf %31, %32 : vector<2x32xf32>
      %c0_27 = arith.constant 0 : index
      %c0_28 = arith.constant 0 : index
      %34 = vector.load %arg5[%c0_27, %c0_28] : memref<2x32xf32, #tpu.memory_space<vmem>>, vector<2x32xf32>
      tpu.vector_store %arg5[%c0_27, %c0_28], %33 {strides = array<i32>} : memref<2x32xf32, #tpu.memory_space<vmem>>, vector<2x32xf32>,
    } else {
    }
    return
  }
  func.func @transform_0(%arg0: i32, %arg1: i32) -> (i32, i32, i32) {
    %c0_i32 = arith.constant 0 : i32
    %c0_i32_0 = arith.constant 0 : i32
    return %arg0, %c0_i32, %arg1 : i32, i32, i32
  }
  func.func @transform_1(%arg0: i32, %arg1: i32) -> (i32, i32) {
    %c0_i32 = arith.constant 0 : i32
    %c0_i32_0 = arith.constant 0 : i32
    %c0_i32_1 = arith.constant 0 : i32
    return %c0_i32, %c0_i32_0 : i32, i32
  }
  func.func @transform_2(%arg0: i32, %arg1: i32) -> (i32, i32) {
    %c0_i32 = arith.constant 0 : i32
    %c0_i32_0 = arith.constant 0 : i32
    %c0_i32_1 = arith.constant 0 : i32
    return %c0_i32, %c0_i32_0 : i32, i32
  }
  func.func @transform_3(%arg0: i32, %arg1: i32) -> (i32, i32) {
    %c0_i32 = arith.constant 0 : i32
    %c0_i32_0 = arith.constant 0 : i32
    return %arg0, %c0_i32 : i32, i32
  }
}

</mosaic_0001>

<llo_original>
// kernel: tpu_custom_call.1
$region0: #{tpu_custom_call.1}
  #allocation0 [shape = 'u32[]', space=smem, size = 0x4, offset = 0x4, fixed_abs, tag = 'smem constant byte address 0x4 - core index']
  #allocation1 [shape = 'u32[72,128]{1,0:T(1,128)}', space=vmem, size = 0x9000, scoped, tag = 'internal scratch']
  #allocation2 [shape = 'f32[2,32]{1,0:T(2,128)}', space=vmem, size = 0x400, scoped, tag = 'scratch operand']
  #allocation3 [shape = 'f32[2,32]{1,0:T(2,128)}', space=vmem, size = 0x400, scoped, tag = 'scratch operand']
  %s0 = inlined_call_operand.vmem [shape: f32[2,32,16], index: 0, kind: input, shape index: {}]
  %s1 = inlined_call_operand.vmem [shape: f32[32,2], index: 1, kind: input, shape index: {}]
  %s2 = inlined_call_operand.vmem [shape: f32[2,32], index: 2, kind: input, shape index: {}]
  %s3 = inlined_call_operand.hbm [shape: f32[2,32], index: 3, kind: output, shape index: {}]
  %s4 = sld [smem:[#allocation0]]
  $region30: #{tpu_custom_call.1} parent=0
    _
  %s6 = ssub.s32 1, %s4
  %s7 = scalar_select 0, %s6, %s4
  $region1: #{tpu_custom_call.1} parent=0
    #allocation4 [shape = 'u8[1024]{0}', space=vmem, size = 0x400, scoped, tag = 'output window, operand 0, single buffered']
    #allocation5 [shape = 's32[1]{0}', space=sflag, size = 0x4, scoped, tag = 'scoped memory for tpu_custom_call.1']
    %8 = vsyncpa [#allocation5], 0
    // Predicated region
    $region2: #{tpu_custom_call.1} parent=1 // pred_check
      _
    $region3: #{tpu_custom_call.1} parent=1 // pred_check_branch
      %10 = sbr.rel (0) target = $region5
    $region4: #{tpu_custom_call.1} parent=1 // pred_region
      _
    $region5: #{tpu_custom_call.1} parent=1 // pred_fallthru
      _
    // Predicated region
    $region6: #{tpu_custom_call.1} parent=1 // pred_check
      _
    $region7: #{tpu_custom_call.1} parent=1 // pred_check_branch
      %12 = sbr.rel (0) target = $region9
    $region8: #{tpu_custom_call.1} parent=1 // pred_region
      _
    $region9: #{tpu_custom_call.1} parent=1 // pred_fallthru
      _
    // Predicated region
    $region10: #{tpu_custom_call.1} parent=1 // pred_check
      _
    $region11: #{tpu_custom_call.1} parent=1 // pred_check_branch
      %14 = sbr.rel (0) target = $region13
    $region12: #{tpu_custom_call.1} parent=1 // pred_region
      _
    $region13: #{tpu_custom_call.1} parent=1 // pred_fallthru
      _
    %p15 = scmp.eq.s32.totalorder 0, 0
    // Predicated region
    $region14: #{tpu_custom_call.1} parent=1 // pred_check
      %p16 = pneg %p15
    $region15: #{tpu_custom_call.1} parent=1 // pred_check_branch
      %18 = sbr.rel (%p16) target = $region17
    $region16: #{tpu_custom_call.1} parent=1 // pred_region
      %vm19 = vcmask 254976
      %20 = vst.msk [vmem:[#allocation2] sm:$0x3] %vm19, 0.0
      %21 = vst.msk [vmem:[#allocation3] sm:$0x3] %vm19, -inf
    $region17: #{tpu_custom_call.1} parent=1 // pred_fallthru
      _
    %v22 = vld [vmem:[%s0] sm:$0xff]
    %v23 = vld [vmem:[%s0 + $0x8] sm:$0xff]
    %v24 = vld [vmem:[%s0 + $0x10] sm:$0xff]
    %v25 = vld [vmem:[%s0 + $0x18] sm:$0xff]
    %v26 = vld [vmem:[%s0 + $0x20] sm:$0xff]
    %v27 = vld [vmem:[%s0 + $0x28] sm:$0xff]
    %v28 = vld [vmem:[%s0 + $0x30] sm:$0xff]
    %v29 = vld [vmem:[%s0 + $0x38] sm:$0xff]
    %v30 = vld [vmem:[#allocation2] sm:$0x3]
    %vm31 = vcmask 130048
    %v32 = vsel %vm31, %v22, 0.0
    %33 = vadd.xlane.f32.xlu0 %v32
    %v34 = vpop.xlane.xlu0 %33
    %v35 = vsel %vm31, %v23, 0.0
    %36 = vadd.xlane.f32.xlu0 %v35
    %v37 = vpop.xlane.xlu0 %36
    %v38 = vsel %vm31, %v24, 0.0
    %39 = vadd.xlane.f32.xlu0 %v38
    %v40 = vpop.xlane.xlu0 %39
    %v41 = vsel %vm31, %v25, 0.0
    %42 = vadd.xlane.f32.xlu0 %v41
    %v43 = vpop.xlane.xlu0 %42
    %v44 = vsel %vm31, %v26, 0.0
    %45 = vadd.xlane.f32.xlu0 %v44
    %v46 = vpop.xlane.xlu0 %45
    %v47 = vsel %vm31, %v27, 0.0
    %48 = vadd.xlane.f32.xlu0 %v47
    %v49 = vpop.xlane.xlu0 %48
    %v50 = vsel %vm31, %v28, 0.0
    %51 = vadd.xlane.f32.xlu0 %v50
    %v52 = vpop.xlane.xlu0 %51
    %v53 = vsel %vm31, %v29, 0.0
    %54 = vadd.xlane.f32.xlu0 %v53
    %v55 = vpop.xlane.xlu0 %54
    %v64 = vlaneseq
    %v65 = vand.u32 %v64, 127
    %v66 = vperm.slane %v34, %v65
    %v67 = vadd.s32 %v65, 4294967288
    %v68 = vperm.slane %v37, %v67
    %vm69 = vcmask 130112
    %v70 = vsel %vm69, %v68, %v66
    %v71 = vadd.s32 %v65, 4294967280
    %v72 = vperm.slane %v40, %v71
    %vm73 = vcmask 195712
    %v74 = vsel %vm73, %v72, %v70
    %v75 = vadd.s32 %v65, 4294967272
    %v76 = vperm.slane %v43, %v75
    %vm77 = vcmask 261312
    %v78 = vsel %vm77, %v76, %v74
    %v79 = vperm.slane %v46, %v65
    %v80 = vperm.slane %v49, %v67
    %v81 = vsel %vm69, %v80, %v79
    %v82 = vperm.slane %v52, %v71
    %v83 = vsel %vm73, %v82, %v81
    %v84 = vperm.slane %v55, %v75
    %v85 = vsel %vm77, %v84, %v83
    %vm86 = vcmask 1041409
    %v87 = vsel %vm86, %v85, %v78
    %v89 = vadd.f32 %v30, %v87
    %vm90 = vcmask 254976
    %91 = vst.msk [vmem:[#allocation2] sm:$0x3] %vm90, %v89
    %v92 = vld [vmem:[#allocation3] sm:$0x3]
    %v93 = vsel %vm31, %v22, -inf
    %94 = vmax.xlane.f32.xlu0 %v93
    %v95 = vpop.xlane.xlu0 %94
    %v96 = vsel %vm31, %v23, -inf
    %97 = vmax.xlane.f32.xlu0 %v96
    %v98 = vpop.xlane.xlu0 %97
    %v99 = vsel %vm31, %v24, -inf
    %100 = vmax.xlane.f32.xlu0 %v99
    %v101 = vpop.xlane.xlu0 %100
    %v102 = vsel %vm31, %v25, -inf
    %103 = vmax.xlane.f32.xlu0 %v102
    %v104 = vpop.xlane.xlu0 %103
    %v105 = vsel %vm31, %v26, -inf
    %106 = vmax.xlane.f32.xlu0 %v105
    %v107 = vpop.xlane.xlu0 %106
    %v108 = vsel %vm31, %v27, -inf
    %109 = vmax.xlane.f32.xlu0 %v108
    %v110 = vpop.xlane.xlu0 %109
    %v111 = vsel %vm31, %v28, -inf
    %112 = vmax.xlane.f32.xlu0 %v111
    %v113 = vpop.xlane.xlu0 %112
    %v114 = vsel %vm31, %v29, -inf
    %115 = vmax.xlane.f32.xlu0 %v114
    %v116 = vpop.xlane.xlu0 %115
    %v125 = vperm.slane %v95, %v65
    %v126 = vperm.slane %v98, %v67
    %v127 = vsel %vm69, %v126, %v125
    %v128 = vperm.slane %v101, %v71
    %v129 = vsel %vm73, %v128, %v127
    %v130 = vperm.slane %v104, %v75
    %v131 = vsel %vm77, %v130, %v129
    %v132 = vperm.slane %v107, %v65
    %v133 = vperm.slane %v110, %v67
    %v134 = vsel %vm69, %v133, %v132
    %v135 = vperm.slane %v113, %v71
    %v136 = vsel %vm73, %v135, %v134
    %v137 = vperm.slane %v116, %v75
    %v138 = vsel %vm77, %v137, %v136
    %v139 = vsel %vm86, %v138, %v131
    %v141 = vmax.f32 %v92, %v139
    %142 = vst.msk [vmem:[#allocation3] sm:$0x3] %vm90, %v141
    // Predicated region
    $region18: #{tpu_custom_call.1} parent=1 // pred_check
      %p143 = pneg %p15
    $region19: #{tpu_custom_call.1} parent=1 // pred_check_branch
      %145 = sbr.rel (%p143) target = $region21
    $region20: #{tpu_custom_call.1} parent=1 // pred_region
      %v146 = vld [vmem:[#allocation2] sm:$0x3]
      %v147 = vmul.f32 %v146, 0.0625
      %v148 = vld [vmem:[#allocation3] sm:$0x3]
      %v150 = vrot.slane %v148, 6
      %vm152 = vcmask 1041408
      %v153 = vsel %vm152, %v147, %v150
      %v154 = vld [vmem:[%s1] sm:$0xff]
      %v155 = vld [vmem:[%s1 + $0x8] sm:$0xff]
      %v156 = vld [vmem:[%s1 + $0x10] sm:$0xff]
      %v157 = vld [vmem:[%s1 + $0x18] sm:$0xff]
      %vm158 = vcmask 261120
      %v160 = vsel %vm158, %v153, 0
      %162 = vmatpush.msra.mxu0 0.0
      %163 = vmatpush.msra.mxu0 0.0
      %164 = vmatpush.msra.mxu0 0.0
      %165 = vmatpush.msra.mxu0 0.0
      %166 = vmatpush.msra.mxu0 0.0
      %167 = vmatpush.msra.mxu0 0.0
      %168 = vmatpush.msra.mxu0 0.0
      %169 = vmatpush.msra.mxu0 0.0
      %170 = vmatpush.msra.mxu0 0.0
      %171 = vmatpush.msra.mxu0 0.0
      %172 = vmatpush.msra.mxu0 0.0
      %173 = vmatpush.msra.mxu0 0.0
      %174 = vmatpush.msra.mxu0 %v157
      %175 = vmatpush.msra.mxu0 %v156
      %176 = vmatpush.msra.mxu0 %v155
      %177 = vmatpush.msra.mxu0 %v154
      %178 = vmatmul.f32.gmra.mxu0 %v160
      %v179 = vpop.f32.mrf.mxu0
      %v180 = vadd.f32 0.0, %v179
      %181 = vdwg.mxu0
      %v182 = vmax.f32 %v180, 0.0
      %v183 = vld [vmem:[%s2] sm:$0x3]
      %vm184 = vcmask 15360
      %v186 = vsel %vm184, %v182, 0
      %v189 = vsel %vm152, %v183, 0
      %191 = vmatpush.msra.mxu0 0.0
      %192 = vmatpush.msra.mxu0 0.0
      %193 = vmatpush.msra.mxu0 0.0
      %194 = vmatpush.msra.mxu0 0.0
      %195 = vmatpush.msra.mxu0 0.0
      %196 = vmatpush.msra.mxu0 0.0
      %197 = vmatpush.msra.mxu0 0.0
      %198 = vmatpush.msra.mxu0 0.0
      %199 = vmatpush.msra.mxu0 0.0
      %200 = vmatpush.msra.mxu0 0.0
      %201 = vmatpush.msra.mxu0 0.0
      %202 = vmatpush.msra.mxu0 0.0
      %203 = vmatpush.msra.mxu0 0.0
      %204 = vmatpush.msra.mxu0 0.0
      %205 = vmatpush.msra.mxu0 0.0
      %206 = vmatpush.msra.mxu0 %v189
      %207 = vmatmul.f32.gmra.mxu0 %v186
      %v208 = vpop.f32.mrf.mxu0
      %v209 = vadd.f32 0.0, %v208
      %210 = vdwg.mxu0
      %v211 = vxor.u32 %v209, 2147483648
      %v212 = vmul.f32 %v211, 1.442695
      %v213 = vpow.pop %v212
      %v214 = vadd.f32 %v213, 1.0
      %v215 = vrcp.pop %v214
      %v216 = vmul.f32 %v214, %v215
      %v217 = vsub.f32 1.0, %v216
      %v218 = vmul.f32 %v215, %v217
      %v219 = vadd.f32 %v215, %v218
      %vm220 = vweird.f32 %v214
      %vm221 = vweird.f32 %v215
      %vm222 = vmor %vm220, %vm221
      %v223 = vsel %vm222, %v215, %v219
      %v224 = vand.u32 2147483647, %v214
      %vm225 = vcmp.eq.f32.partialorder %v224, 8.507059e+37
      %v226 = vand.u32 %v214, 2147483648
      %v227 = vor.u32 1.1754944e-38, %v226
      %v228 = vsel %vm225, %v227, %v223
      %v229 = vmul.f32 1.0, %v228
      %v231 = vrot.slane %v229, 2
      %v233 = vadd.f32 %v229, %v231
      %234 = vst.msk [vmem:[#allocation4] sm:$0x3] %vm90, %v233
    $region21: #{tpu_custom_call.1} parent=1 // pred_fallthru
      _
    // Predicated region
    $region22: #{tpu_custom_call.1} parent=1 // pred_check
      _
    $region23: #{tpu_custom_call.1} parent=1 // pred_check_branch
      %236 = sbr.rel (0) target = $region25
    $region24: #{tpu_custom_call.1} parent=1 // pred_region
      %238 = vsyncadd [#allocation5], 0
      %s240 = sshll.u32 [#allocation4], 4
      %s241 = int_to_ptr.vmem [resolvable:$true] %s240
      %s242 = sshll.u32 %s3, 4
      %s243 = int_to_ptr.hbm [resolvable:$true] %s242
      %245 = dma.vmem_to_hbm [thread:$0]  %s241, 32, %s243, [#allocation5]
    $region25: #{tpu_custom_call.1} parent=1 // pred_fallthru
      _
    // Predicated region
    $region26: #{tpu_custom_call.1} parent=1 // pred_check
      _
    $region27: #{tpu_custom_call.1} parent=1 // pred_check_branch
      %247 = sbr.rel (0) target = $region29
    $region28: #{tpu_custom_call.1} parent=1 // pred_region
      %249 = dma.done [#allocation5], 32
    $region29: #{tpu_custom_call.1} parent=1 // pred_fallthru
      _
    %250 = vsyncpa [#allocation5], 1

</llo_original>
